<compile_context>
chip_gen: v7x
topology: tpu7x:2x2x1
jax: 0.10.0
libtpu: 0.0.40
codegen_flags: <defaults>
</compile_context>

<pallas_src>
import functools

import jax
import jax.numpy as jnp
from jax.experimental import pallas as pl
from jax.experimental.pallas import tpu as pltpu


# ------------------------------ helpers ------------------------------ #

def _round_up(x, m):
    return ((x + m - 1) // m) * m


def _elu(x):
    # nn.ELU(alpha=1.0); clamp before exp so the unselected branch never overflows.
    return jnp.where(x > 0, x, jnp.exp(jnp.minimum(x, 0.0)) - 1.0)


# ------------------------------ kernel ------------------------------ #

def _actor_kernel(x_ref, noise_ref, w0_ref, b0_ref, w1_ref, b1_ref,
                  w2_ref, b2_ref, logits_ref, probs_ref, sample_ref,
                  *, action_size):
    # ----- MLP: Linear -> ELU -> Linear -> ELU -> Linear -----
    # Matmul operands are bf16 (native MXU dtype), accumulation + epilogue in f32.
    h = jnp.dot(x_ref[...], w0_ref[...],
                preferred_element_type=jnp.float32) + b0_ref[...]
    h = _elu(h)
    h = jnp.dot(h.astype(jnp.bfloat16), w1_ref[...],
                preferred_element_type=jnp.float32) + b1_ref[...]
    h = _elu(h)
    logits = jnp.dot(h.astype(jnp.bfloat16), w2_ref[...],
                     preferred_element_type=jnp.float32) + b2_ref[...]

    # Lane-dense store; padded columns are sliced off in the wrapper.
    logits_ref[...] = logits

    lane = jax.lax.broadcasted_iota(jnp.int32, logits.shape, 1)
    valid = lane < action_size
    masked = jnp.where(valid, logits, jnp.float32(-1e30))

    # OneHotCategorical(logits).probs == softmax over the valid action lanes.
    m = jnp.max(masked, axis=-1, keepdims=True)
    e = jnp.exp(masked - m)                      # exactly 0 on padded lanes
    denom = jnp.sum(e, axis=-1, keepdims=True)
    probs_ref[...] = e / denom

    # Fused categorical sample via the exponential race (== Gumbel-max):
    #   argmax_i e_i / E_i,  E_i ~ Exp(1)   selects lane i with prob e_i / sum(e).
    # Reuses the softmax numerator e; Exp(1) noise comes in pre-generated.
    z = e / noise_ref[...]                       # 0 on padded lanes, > 0 on valid ones
    zmax = jnp.max(z, axis=-1, keepdims=True)
    # smallest lane attaining the max -> exactly one 1 per row even on ties
    cand = jnp.where(z >= zmax, lane, jnp.int32(logits.shape[-1]))
    idx = jnp.min(cand, axis=-1, keepdims=True)
    sample_ref[...] = (lane == idx).astype(sample_ref.dtype)


# ------------------------------ wrapper ------------------------------ #

@functools.partial(jax.jit, static_argnames=("action_size",))
def actor_forward(model_state, padded_params, key, *, action_size):
    """Fused MLP + softmax + categorical sample.

    Returns (action, logits, probs); the straight-through estimator and all
    pad/slice plumbing live under the same jit as the pallas_call.
    """
    w0, b0, w1, b1, w2, b2 = padded_params
    batch, in_dim = model_state.shape
    in_pad, node_pad = w0.shape
    act_pad = w2.shape[1]

    # Pad batch to a sublane multiple.  Split into >=2 grid steps whenever possible
    # (keeps v7x's second TensorCore busy under "parallel"), capping the tile at
    # 512 rows so per-grid-step overhead stays amortized at large batch.
    pb = _round_up(max(batch, 8), 8)
    if pb <= 8:
        tb = pb
    else:
        tb = min(512, _round_up(pl.cdiv(pb, 2), 8))
        pb = _round_up(pb, tb)

    x = jnp.pad(model_state.astype(jnp.float32),
                ((0, pb - batch), (0, in_pad - in_dim))).astype(jnp.bfloat16)
    # Exp(1) noise for the in-kernel exponential-race sample (clamped away from 0).
    noise = jnp.maximum(jax.random.exponential(key, (pb, act_pad), jnp.float32),
                        jnp.float32(1e-20))

    kernel = functools.partial(_actor_kernel, action_size=action_size)
    out_f32 = jax.ShapeDtypeStruct((pb, act_pad), jnp.float32)
    out_bf16 = jax.ShapeDtypeStruct((pb, act_pad), jnp.bfloat16)

    # NOTE: the six weight/bias specs have a constant block index; on HW-only builds
    # pipeline_mode=pl.Buffered(1) would drop their (useless) double buffering.
    logits, probs, sample = pl.pallas_call(
        kernel,
        out_shape=(out_f32, out_f32, out_bf16),
        grid_spec=pltpu.PrefetchScalarGridSpec(
            num_scalar_prefetch=0,
            grid=(pb // tb,),
            in_specs=[
                pl.BlockSpec((tb, in_pad), lambda i: (i, 0)),
                pl.BlockSpec((tb, act_pad), lambda i: (i, 0)),
                pl.BlockSpec((in_pad, node_pad), lambda i: (0, 0)),
                pl.BlockSpec((1, node_pad), lambda i: (0, 0)),
                pl.BlockSpec((node_pad, node_pad), lambda i: (0, 0)),
                pl.BlockSpec((1, node_pad), lambda i: (0, 0)),
                pl.BlockSpec((node_pad, act_pad), lambda i: (0, 0)),
                pl.BlockSpec((1, act_pad), lambda i: (0, 0)),
            ],
            out_specs=(
                pl.BlockSpec((tb, act_pad), lambda i: (i, 0)),
                pl.BlockSpec((tb, act_pad), lambda i: (i, 0)),
                pl.BlockSpec((tb, act_pad), lambda i: (i, 0)),
            ),
        ),
        compiler_params=pltpu.CompilerParams(
            dimension_semantics=("parallel",)),
    )(x, noise, w0, b0, w1, b1, w2, b2)

    logits = logits[:batch, :action_size]
    probs = probs[:batch, :action_size]
    sample = sample[:batch, :action_size].astype(jnp.float32)
    # straight-through estimator: action = sample + probs - probs.detach()
    action = sample + probs - jax.lax.stop_gradient(probs)
    return action, logits, probs


# --------------------- DiscreteActionModel glue --------------------- #

class DiscreteActionModelPallas:
    """dist == 'one_hot' path of DiscreteActionModel.forward (ELU activation, 2 layers)."""

    def __init__(self, action_size, deter_size, stoch_size, embedding_size,
                 actor_info, expl_info, theta_size=0, key=jax.random.PRNGKey(0)):
        assert actor_info["dist"] == "one_hot"
        assert actor_info["layers"] == 2  # kernel is specialized for 2 hidden layers
        self.action_size = action_size
        in_dim = deter_size + stoch_size + theta_size
        node = actor_info["node_size"]

        # Deterministic PyTorch-style init: U(-1/sqrt(fan_in), 1/sqrt(fan_in)).
        def linear_init(k, fan_in, fan_out):
            kw, kb = jax.random.split(k)
            bound = 1.0 / jnp.sqrt(jnp.float32(fan_in))
            w = jax.random.uniform(kw, (fan_in, fan_out), jnp.float32, -bound, bound)
            b = jax.random.uniform(kb, (1, fan_out), jnp.float32, -bound, bound)
            return w, b

        k0, k1, k2 = jax.random.split(key, 3)
        w0, b0 = linear_init(k0, in_dim, node)
        w1, b1 = linear_init(k1, node, node)
        w2, b2 = linear_init(k2, node, action_size)
        self.params = (w0, b0, w1, b1, w2, b2)  # unpadded f32 (reference / export)

        # Zero-pad all feature dims to lane multiples once at init.  Padding is exact:
        # padded input cols / weight rows-cols / biases are zero and ELU(0) == 0, so
        # padded hidden units contribute nothing.  Weights are stored bf16 (MXU-native),
        # biases stay f32 (added after the f32 accumulation).
        in_pad = _round_up(in_dim, 128)
        node_pad = _round_up(node, 128)
        act_pad = _round_up(action_size, 128)

        def pad2(a, rows, cols):
            return jnp.pad(a, ((0, rows - a.shape[0]), (0, cols - a.shape[1])))

        self.padded_params = (
            pad2(w0, in_pad, node_pad).astype(jnp.bfloat16), pad2(b0, 1, node_pad),
            pad2(w1, node_pad, node_pad).astype(jnp.bfloat16), pad2(b1, 1, node_pad),
            pad2(w2, node_pad, act_pad).astype(jnp.bfloat16), pad2(b2, 1, act_pad),
        )

    def __call__(self, model_state, seed=0):
        key = jax.random.PRNGKey(seed) if isinstance(seed, int) else seed
        action, logits, probs = actor_forward(
            model_state, self.padded_params, key, action_size=self.action_size)
        # TODO(synk): torch.distributions.OneHotCategorical object itself has no
        #             Pallas/JAX equivalent; we return (logits, probs) instead.
        return action, (logits, probs)


# ------------------------------ main ------------------------------ #

if __name__ == "__main__":
    key = jax.random.PRNGKey(0)
    k_param, k_state = jax.random.split(key)

    # Small CartPole-like config.
    batch = 8
    deter_size, stoch_size, theta_size = 32, 16, 0
    embedding_size = 32
    actor_info = {"layers": 2, "node_size": 64, "activation": "elu",
                  "dist": "one_hot"}
    expl_info = {"train_noise": 0.3, "eval_noise": 0.0, "expl_min": 0.05,
                 "expl_decay": 7000, "expl_type": "epsilon_greedy"}
    action_size = 2

    model = DiscreteActionModelPallas(
        action_size, deter_size, stoch_size, embedding_size,
        actor_info, expl_info, theta_size=theta_size, key=k_param)

    model_state = jax.random.normal(
        k_state, (batch, deter_size + stoch_size + theta_size), jnp.float32)

    action, (logits, probs) = model(model_state, seed=1234)
    action = jax.block_until_ready(action)
    logits = jax.block_until_ready(logits)
    probs = jax.block_until_ready(probs)

    # Sanity checks against a pure-JAX reference using the same bf16-operand /
    # f32-accumulation matmuls as the kernel (padding is exact so unpadded ok).
    w0, b0, w1, b1, w2, b2 = model.params

    def bmm(a, w):
        return jnp.dot(a.astype(jnp.bfloat16), w.astype(jnp.bfloat16),
                       preferred_element_type=jnp.float32)

    h = jax.nn.elu(bmm(model_state, w0) + b0)
    h = jax.nn.elu(bmm(h, w1) + b1)
    ref_logits = bmm(h, w2) + b2
    ref_probs = jax.nn.softmax(ref_logits, axis=-1)

    assert logits.shape == (batch, action_size)
    assert jnp.allclose(logits, ref_logits, atol=1e-3, rtol=1e-3)
    assert jnp.allclose(probs, ref_probs, atol=2e-3, rtol=2e-3)
    assert action.shape == (batch, action_size)
    # numerically action == one-hot sample (probs - stop_grad(probs) == 0):
    assert jnp.allclose(jnp.sum(action, axis=-1), 1.0, atol=1e-5)
    assert bool(jnp.all((jnp.abs(action) < 1e-5) | (jnp.abs(action - 1.0) < 1e-5)))

    print("KERNEL_OK")
</pallas_src>

<mosaic_0001>
module attributes {stable_mosaic.version = 11 : i64} {
  func.func @_actor_kernel(%arg0: i32, %arg1: memref<8x128xbf16, #tpu.memory_space<vmem>>, %arg2: memref<8x128xf32, #tpu.memory_space<vmem>>, %arg3: memref<128x128xbf16, #tpu.memory_space<vmem>>, %arg4: memref<1x128xf32, #tpu.memory_space<vmem>>, %arg5: memref<128x128xbf16, #tpu.memory_space<vmem>>, %arg6: memref<1x128xf32, #tpu.memory_space<vmem>>, %arg7: memref<128x128xbf16, #tpu.memory_space<vmem>>, %arg8: memref<1x128xf32, #tpu.memory_space<vmem>>, %arg9: memref<8x128xf32, #tpu.memory_space<vmem>>, %arg10: memref<8x128xf32, #tpu.memory_space<vmem>>, %arg11: memref<8x128xbf16, #tpu.memory_space<vmem>>) attributes {dimension_semantics = [#tpu.dimension_semantics<parallel>], iteration_bounds = array<i64: 1>, scalar_prefetch = 0 : i64, scratch_operands = 0 : i64, tpu.core_type = #tpu.core_type<tc>, window_params = [{transform_indices = @transform_0, window_bounds = array<i64: 8, 128>}, {transform_indices = @transform_1, window_bounds = array<i64: 8, 128>}, {pipeline_mode = #tpu.pipeline_mode<synchronous>, transform_indices = @transform_2, window_bounds = array<i64: 128, 128>}, {pipeline_mode = #tpu.pipeline_mode<synchronous>, transform_indices = @transform_3, window_bounds = array<i64: 1, 128>}, {pipeline_mode = #tpu.pipeline_mode<synchronous>, transform_indices = @transform_4, window_bounds = array<i64: 128, 128>}, {pipeline_mode = #tpu.pipeline_mode<synchronous>, transform_indices = @transform_5, window_bounds = array<i64: 1, 128>}, {pipeline_mode = #tpu.pipeline_mode<synchronous>, transform_indices = @transform_6, window_bounds = array<i64: 128, 128>}, {pipeline_mode = #tpu.pipeline_mode<synchronous>, transform_indices = @transform_7, window_bounds = array<i64: 1, 128>}, {transform_indices = @transform_8, window_bounds = array<i64: 8, 128>}, {transform_indices = @transform_9, window_bounds = array<i64: 8, 128>}, {transform_indices = @transform_10, window_bounds = array<i64: 8, 128>}]} {
    %c0 = arith.constant 0 : index
    %c0_0 = arith.constant 0 : index
    %0 = vector.load %arg1[%c0, %c0_0] : memref<8x128xbf16, #tpu.memory_space<vmem>>, vector<8x128xbf16>
    %c0_1 = arith.constant 0 : index
    %c0_2 = arith.constant 0 : index
    %1 = vector.load %arg3[%c0_1, %c0_2] : memref<128x128xbf16, #tpu.memory_space<vmem>>, vector<128x128xbf16>
    %cst = arith.constant dense<0.000000e+00> : vector<8x128xf32>
    %2 = tpu.matmul %0, %1, %cst {dimension_numbers = #tpu.dot_dimension_numbers<[1], [0], [0], [1], [0, 0, 1, 1], [], []>} : vector<8x128xbf16>, vector<128x128xbf16>, vector<8x128xf32> -> vector<8x128xf32>
    %c0_3 = arith.constant 0 : index
    %c0_4 = arith.constant 0 : index
    %3 = vector.load %arg4[%c0_3, %c0_4] : memref<1x128xf32, #tpu.memory_space<vmem>>, vector<1x128xf32>
    %4 = vector.broadcast %3 : vector<1x128xf32> to vector<8x128xf32>
    %5 = arith.addf %2, %4 : vector<8x128xf32>
    %cst_5 = arith.constant 0.000000e+00 : f32
    %6 = vector.broadcast %cst_5 : f32 to vector<8x128xf32>
    %7 = arith.cmpf ogt, %5, %6 : vector<8x128xf32>
    %cst_6 = arith.constant 0.000000e+00 : f32
    %8 = vector.broadcast %cst_6 : f32 to vector<8x128xf32>
    %9 = arith.minimumf %5, %8 : vector<8x128xf32>
    %10 = math.exp %9 : vector<8x128xf32>
    %cst_7 = arith.constant 1.000000e+00 : f32
    %11 = vector.broadcast %cst_7 : f32 to vector<8x128xf32>
    %12 = arith.subf %10, %11 : vector<8x128xf32>
    %13 = arith.select %7, %5, %12 : vector<8x128xi1>, vector<8x128xf32>
    %14 = arith.truncf %13 : vector<8x128xf32> to vector<8x128xbf16>
    %c0_8 = arith.constant 0 : index
    %c0_9 = arith.constant 0 : index
    %15 = vector.load %arg5[%c0_8, %c0_9] : memref<128x128xbf16, #tpu.memory_space<vmem>>, vector<128x128xbf16>
    %cst_10 = arith.constant dense<0.000000e+00> : vector<8x128xf32>
    %16 = tpu.matmul %14, %15, %cst_10 {dimension_numbers = #tpu.dot_dimension_numbers<[1], [0], [0], [1], [0, 0, 1, 1], [], []>} : vector<8x128xbf16>, vector<128x128xbf16>, vector<8x128xf32> -> vector<8x128xf32>
    %c0_11 = arith.constant 0 : index
    %c0_12 = arith.constant 0 : index
    %17 = vector.load %arg6[%c0_11, %c0_12] : memref<1x128xf32, #tpu.memory_space<vmem>>, vector<1x128xf32>
    %18 = vector.broadcast %17 : vector<1x128xf32> to vector<8x128xf32>
    %19 = arith.addf %16, %18 : vector<8x128xf32>
    %cst_13 = arith.constant 0.000000e+00 : f32
    %20 = vector.broadcast %cst_13 : f32 to vector<8x128xf32>
    %21 = arith.cmpf ogt, %19, %20 : vector<8x128xf32>
    %cst_14 = arith.constant 0.000000e+00 : f32
    %22 = vector.broadcast %cst_14 : f32 to vector<8x128xf32>
    %23 = arith.minimumf %19, %22 : vector<8x128xf32>
    %24 = math.exp %23 : vector<8x128xf32>
    %cst_15 = arith.constant 1.000000e+00 : f32
    %25 = vector.broadcast %cst_15 : f32 to vector<8x128xf32>
    %26 = arith.subf %24, %25 : vector<8x128xf32>
    %27 = arith.select %21, %19, %26 : vector<8x128xi1>, vector<8x128xf32>
    %28 = arith.truncf %27 : vector<8x128xf32> to vector<8x128xbf16>
    %c0_16 = arith.constant 0 : index
    %c0_17 = arith.constant 0 : index
    %29 = vector.load %arg7[%c0_16, %c0_17] : memref<128x128xbf16, #tpu.memory_space<vmem>>, vector<128x128xbf16>
    %cst_18 = arith.constant dense<0.000000e+00> : vector<8x128xf32>
    %30 = tpu.matmul %28, %29, %cst_18 {dimension_numbers = #tpu.dot_dimension_numbers<[1], [0], [0], [1], [0, 0, 1, 1], [], []>} : vector<8x128xbf16>, vector<128x128xbf16>, vector<8x128xf32> -> vector<8x128xf32>
    %c0_19 = arith.constant 0 : index
    %c0_20 = arith.constant 0 : index
    %31 = vector.load %arg8[%c0_19, %c0_20] : memref<1x128xf32, #tpu.memory_space<vmem>>, vector<1x128xf32>
    %32 = vector.broadcast %31 : vector<1x128xf32> to vector<8x128xf32>
    %33 = arith.addf %30, %32 : vector<8x128xf32>
    %c0_21 = arith.constant 0 : index
    %c0_22 = arith.constant 0 : index
    %34 = vector.load %arg9[%c0_21, %c0_22] : memref<8x128xf32, #tpu.memory_space<vmem>>, vector<8x128xf32>
    tpu.vector_store %arg9[%c0_21, %c0_22], %33 {strides = array<i32>} : memref<8x128xf32, #tpu.memory_space<vmem>>, vector<8x128xf32>,
    %35 = tpu.iota {dimensions = array<i32: 1>} : vector<8x128xi32>
    %c2_i32 = arith.constant 2 : i32
    %36 = vector.broadcast %c2_i32 : i32 to vector<8x128xi32>
    %37 = arith.cmpi slt, %35, %36 : vector<8x128xi32>
    %cst_23 = arith.constant -1.000000e+30 : f32
    %38 = vector.broadcast %cst_23 : f32 to vector<8x128xf32>
    %39 = arith.select %37, %33, %38 : vector<8x128xi1>, vector<8x128xf32>
    %cst_24 = arith.constant dense<0xFF800000> : vector<8xf32>
    %40 = vector.multi_reduction <maximumf>, %39, %cst_24 [1] : vector<8x128xf32> to vector<8xf32>
    %41 = vector.shape_cast %40 : vector<8xf32> to vector<8x1xf32>
    %42 = vector.broadcast %41 : vector<8x1xf32> to vector<8x128xf32>
    %43 = arith.subf %39, %42 : vector<8x128xf32>
    %44 = math.exp %43 : vector<8x128xf32>
    %cst_25 = arith.constant dense<0.000000e+00> : vector<8xf32>
    %45 = vector.multi_reduction <add>, %44, %cst_25 [1] : vector<8x128xf32> to vector<8xf32>
    %46 = vector.shape_cast %45 : vector<8xf32> to vector<8x1xf32>
    %47 = vector.broadcast %46 : vector<8x1xf32> to vector<8x128xf32>
    %48 = arith.divf %44, %47 : vector<8x128xf32>
    %c0_26 = arith.constant 0 : index
    %c0_27 = arith.constant 0 : index
    %49 = vector.load %arg10[%c0_26, %c0_27] : memref<8x128xf32, #tpu.memory_space<vmem>>, vector<8x128xf32>
    tpu.vector_store %arg10[%c0_26, %c0_27], %48 {strides = array<i32>} : memref<8x128xf32, #tpu.memory_space<vmem>>, vector<8x128xf32>,
    %c0_28 = arith.constant 0 : index
    %c0_29 = arith.constant 0 : index
    %50 = vector.load %arg2[%c0_28, %c0_29] : memref<8x128xf32, #tpu.memory_space<vmem>>, vector<8x128xf32>
    %51 = arith.divf %44, %50 : vector<8x128xf32>
    %cst_30 = arith.constant dense<0xFF800000> : vector<8xf32>
    %52 = vector.multi_reduction <maximumf>, %51, %cst_30 [1] : vector<8x128xf32> to vector<8xf32>
    %53 = vector.shape_cast %52 : vector<8xf32> to vector<8x1xf32>
    %54 = vector.broadcast %53 : vector<8x1xf32> to vector<8x128xf32>
    %55 = arith.cmpf oge, %51, %54 : vector<8x128xf32>
    %c128_i32 = arith.constant 128 : i32
    %56 = vector.broadcast %c128_i32 : i32 to vector<8x128xi32>
    %57 = arith.select %55, %35, %56 : vector<8x128xi1>, vector<8x128xi32>
    %cst_31 = arith.constant dense<2147483647> : vector<8xi32>
    %58 = vector.multi_reduction <minsi>, %57, %cst_31 [1] : vector<8x128xi32> to vector<8xi32>
    %59 = vector.shape_cast %58 : vector<8xi32> to vector<8x1xi32>
    %60 = vector.broadcast %59 : vector<8x1xi32> to vector<8x128xi32>
    %61 = arith.cmpi eq, %35, %60 : vector<8x128xi32>
    %62 = arith.extui %61 : vector<8x128xi1> to vector<8x128xi32>
    %63 = arith.sitofp %62 : vector<8x128xi32> to vector<8x128xf32>
    %64 = arith.truncf %63 : vector<8x128xf32> to vector<8x128xbf16>
    %c0_32 = arith.constant 0 : index
    %c0_33 = arith.constant 0 : index
    %65 = vector.load %arg11[%c0_32, %c0_33] : memref<8x128xbf16, #tpu.memory_space<vmem>>, vector<8x128xbf16>
    tpu.vector_store %arg11[%c0_32, %c0_33], %64 {strides = array<i32>} : memref<8x128xbf16, #tpu.memory_space<vmem>>, vector<8x128xbf16>,
    return
  }
  func.func @transform_0(%arg0: i32) -> (i32, i32) {
    %c0_i32 = arith.constant 0 : i32
    %c0_i32_0 = arith.constant 0 : i32
    return %arg0, %c0_i32 : i32, i32
  }
  func.func @transform_1(%arg0: i32) -> (i32, i32) {
    %c0_i32 = arith.constant 0 : i32
    %c0_i32_0 = arith.constant 0 : i32
    return %arg0, %c0_i32 : i32, i32
  }
  func.func @transform_2(%arg0: i32) -> (i32, i32) {
    %c0_i32 = arith.constant 0 : i32
    %c0_i32_0 = arith.constant 0 : i32
    %c0_i32_1 = arith.constant 0 : i32
    return %c0_i32, %c0_i32_0 : i32, i32
  }
  func.func @transform_3(%arg0: i32) -> (i32, i32) {
    %c0_i32 = arith.constant 0 : i32
    %c0_i32_0 = arith.constant 0 : i32
    %c0_i32_1 = arith.constant 0 : i32
    return %c0_i32, %c0_i32_0 : i32, i32
  }
  func.func @transform_4(%arg0: i32) -> (i32, i32) {
    %c0_i32 = arith.constant 0 : i32
    %c0_i32_0 = arith.constant 0 : i32
    %c0_i32_1 = arith.constant 0 : i32
    return %c0_i32, %c0_i32_0 : i32, i32
  }
  func.func @transform_5(%arg0: i32) -> (i32, i32) {
    %c0_i32 = arith.constant 0 : i32
    %c0_i32_0 = arith.constant 0 : i32
    %c0_i32_1 = arith.constant 0 : i32
    return %c0_i32, %c0_i32_0 : i32, i32
  }
  func.func @transform_6(%arg0: i32) -> (i32, i32) {
    %c0_i32 = arith.constant 0 : i32
    %c0_i32_0 = arith.constant 0 : i32
    %c0_i32_1 = arith.constant 0 : i32
    return %c0_i32, %c0_i32_0 : i32, i32
  }
  func.func @transform_7(%arg0: i32) -> (i32, i32) {
    %c0_i32 = arith.constant 0 : i32
    %c0_i32_0 = arith.constant 0 : i32
    %c0_i32_1 = arith.constant 0 : i32
    return %c0_i32, %c0_i32_0 : i32, i32
  }
  func.func @transform_8(%arg0: i32) -> (i32, i32) {
    %c0_i32 = arith.constant 0 : i32
    %c0_i32_0 = arith.constant 0 : i32
    return %arg0, %c0_i32 : i32, i32
  }
  func.func @transform_9(%arg0: i32) -> (i32, i32) {
    %c0_i32 = arith.constant 0 : i32
    %c0_i32_0 = arith.constant 0 : i32
    return %arg0, %c0_i32 : i32, i32
  }
  func.func @transform_10(%arg0: i32) -> (i32, i32) {
    %c0_i32 = arith.constant 0 : i32
    %c0_i32_0 = arith.constant 0 : i32
    return %arg0, %c0_i32 : i32, i32
  }
}

</mosaic_0001>

<llo_original>
// kernel: actor_forward.1
$region0: #{actor_forward.1}
  #allocation0 [shape = 'u32[]', space=smem, size = 0x4, offset = 0x4, fixed_abs, tag = 'smem constant byte address 0x4 - core index']
  #allocation1 [shape = 'u32[144,128]{1,0:T(1,128)}', space=vmem, size = 0x12000, scoped, tag = 'internal scratch']
  %s0 = inlined_call_operand.vmem [shape: bf16[8,128], index: 0, kind: input, shape index: {}]
  %s1 = inlined_call_operand.vmem [shape: f32[8,128], index: 1, kind: input, shape index: {}]
  %s2 = inlined_call_operand.vmem [shape: bf16[128,128], index: 2, kind: input, shape index: {}]
  %s3 = inlined_call_operand.vmem [shape: f32[1,128], index: 3, kind: input, shape index: {}]
  %s4 = inlined_call_operand.hbm [shape: bf16[128,128], index: 4, kind: input, shape index: {}]
  %s5 = inlined_call_operand.vmem [shape: f32[1,128], index: 5, kind: input, shape index: {}]
  %s6 = inlined_call_operand.hbm [shape: bf16[128,128], index: 6, kind: input, shape index: {}]
  %s7 = inlined_call_operand.vmem [shape: f32[1,128], index: 7, kind: input, shape index: {}]
  %s8 = inlined_call_operand.vmem [shape: f32[8,128], index: 8, kind: output, shape index: {0}]
  %s9 = inlined_call_operand.vmem [shape: f32[8,128], index: 9, kind: output, shape index: {1}]
  %s10 = inlined_call_operand.vmem [shape: bf16[8,128], index: 10, kind: output, shape index: {2}]
  %11 = xla_tuple %s8, %s9, %s10
  %s12 = sld [smem:[#allocation0]]
  $region66: #{actor_forward.1} parent=0
    _
  %s14 = ssub.s32 1, %s12
  %s15 = scalar_select 0, %s14, %s12
  $region1: #{actor_forward.1} parent=0
    #allocation2 [shape = 'u8[32768]{0}', space=vmem, size = 0x8000, scoped, tag = 'input window, operand 4, single buffered']
    #allocation3 [shape = 's32[1]{0}', space=sflag, size = 0x4, scoped, tag = 'scoped memory for actor_forward.1']
    #allocation4 [shape = 'u8[32768]{0}', space=vmem, size = 0x8000, scoped, tag = 'input window, operand 6, single buffered']
    #allocation5 [shape = 's32[1]{0}', space=sflag, size = 0x4, scoped, tag = 'scoped memory for actor_forward.1']
    %16 = vsyncpa [#allocation3], 0
    %17 = vsyncpa [#allocation5], 0
    // Predicated region
    $region2: #{actor_forward.1} parent=1 // pred_check
      _
    $region3: #{actor_forward.1} parent=1 // pred_check_branch
      %19 = sbr.rel (0) target = $region5
    $region4: #{actor_forward.1} parent=1 // pred_region
      _
    $region5: #{actor_forward.1} parent=1 // pred_fallthru
      _
    // Predicated region
    $region6: #{actor_forward.1} parent=1 // pred_check
      _
    $region7: #{actor_forward.1} parent=1 // pred_check_branch
      %21 = sbr.rel (0) target = $region9
    $region8: #{actor_forward.1} parent=1 // pred_region
      _
    $region9: #{actor_forward.1} parent=1 // pred_fallthru
      _
    // Predicated region
    $region10: #{actor_forward.1} parent=1 // pred_check
      _
    $region11: #{actor_forward.1} parent=1 // pred_check_branch
      %23 = sbr.rel (0) target = $region13
    $region12: #{actor_forward.1} parent=1 // pred_region
      _
    $region13: #{actor_forward.1} parent=1 // pred_fallthru
      _
    // Predicated region
    $region14: #{actor_forward.1} parent=1 // pred_check
      _
    $region15: #{actor_forward.1} parent=1 // pred_check_branch
      %25 = sbr.rel (0) target = $region17
    $region16: #{actor_forward.1} parent=1 // pred_region
      _
    $region17: #{actor_forward.1} parent=1 // pred_fallthru
      _
    // Predicated region
    $region18: #{actor_forward.1} parent=1 // pred_check
      _
    $region19: #{actor_forward.1} parent=1 // pred_check_branch
      %27 = sbr.rel (0) target = $region21
    $region20: #{actor_forward.1} parent=1 // pred_region
      %s29 = ssub.s32 1024, 1024
      %30 = vsyncadd [#allocation3], %s29
      %s31 = sshll.u32 [#allocation2], 4
      %s32 = int_to_ptr.vmem [resolvable:$true] %s31
      %37 = dma.hbm_to_vmem [thread:$0]  %s4, 1024, %s32, [#allocation3], 64, 64, 4
    $region21: #{actor_forward.1} parent=1 // pred_fallthru
      _
    // Predicated region
    $region22: #{actor_forward.1} parent=1 // pred_check
      _
    $region23: #{actor_forward.1} parent=1 // pred_check_branch
      %39 = sbr.rel (0) target = $region25
    $region24: #{actor_forward.1} parent=1 // pred_region
      _
    $region25: #{actor_forward.1} parent=1 // pred_fallthru
      _
    // Predicated region
    $region26: #{actor_forward.1} parent=1 // pred_check
      _
    $region27: #{actor_forward.1} parent=1 // pred_check_branch
      %41 = sbr.rel (0) target = $region29
    $region28: #{actor_forward.1} parent=1 // pred_region
      %s43 = ssub.s32 1024, 1024
      %44 = vsyncadd [#allocation5], %s43
      %s45 = sshll.u32 [#allocation4], 4
      %s46 = int_to_ptr.vmem [resolvable:$true] %s45
      %51 = dma.hbm_to_vmem [thread:$0]  %s6, 1024, %s46, [#allocation5], 64, 64, 4
    $region29: #{actor_forward.1} parent=1 // pred_fallthru
      _
    // Predicated region
    $region30: #{actor_forward.1} parent=1 // pred_check
      _
    $region31: #{actor_forward.1} parent=1 // pred_check_branch
      %53 = sbr.rel (0) target = $region33
    $region32: #{actor_forward.1} parent=1 // pred_region
      _
    $region33: #{actor_forward.1} parent=1 // pred_fallthru
      _
    // Predicated region
    $region34: #{actor_forward.1} parent=1 // pred_check
      _
    $region35: #{actor_forward.1} parent=1 // pred_check_branch
      %55 = sbr.rel (0) target = $region37
    $region36: #{actor_forward.1} parent=1 // pred_region
      %56 = dma.done [#allocation3], 1024
    $region37: #{actor_forward.1} parent=1 // pred_fallthru
      _
    // Predicated region
    $region38: #{actor_forward.1} parent=1 // pred_check
      _
    $region39: #{actor_forward.1} parent=1 // pred_check_branch
      %58 = sbr.rel (0) target = $region41
    $region40: #{actor_forward.1} parent=1 // pred_region
      %59 = dma.done [#allocation5], 1024
    $region41: #{actor_forward.1} parent=1 // pred_fallthru
      _
    %v61 = vld [vmem:[%s0] sm:$0xf]
    %v62 = vld [vmem:[%s2] sm:$0xf]
    %v63 = vld [vmem:[%s2 + $0x4] sm:$0xf]
    %v64 = vld [vmem:[%s2 + $0x8] sm:$0xf]
    %v65 = vld [vmem:[%s2 + $0xc] sm:$0xf]
    %v66 = vld [vmem:[%s2 + $0x10] sm:$0xf]
    %v67 = vld [vmem:[%s2 + $0x14] sm:$0xf]
    %v68 = vld [vmem:[%s2 + $0x18] sm:$0xf]
    %v69 = vld [vmem:[%s2 + $0x1c] sm:$0xf]
    %v70 = vld [vmem:[%s2 + $0x20] sm:$0xf]
    %v71 = vld [vmem:[%s2 + $0x24] sm:$0xf]
    %v72 = vld [vmem:[%s2 + $0x28] sm:$0xf]
    %v73 = vld [vmem:[%s2 + $0x2c] sm:$0xf]
    %v74 = vld [vmem:[%s2 + $0x30] sm:$0xf]
    %v75 = vld [vmem:[%s2 + $0x34] sm:$0xf]
    %v76 = vld [vmem:[%s2 + $0x38] sm:$0xf]
    %v77 = vld [vmem:[%s2 + $0x3c] sm:$0xf]
    %v78 = vld [vmem:[%s3] sm:$0x1]
    %v80 = vlaneseq
    %v81 = vshrl.u32 %v80, 7
    %v82 = vsub.s32 0, %v81
    %v83 = vrot.slane %v78, %v82
    %v101 = vunpack.c.l.b16 %v62
    %v102 = vunpack.c.l.b16 %v63
    %v103 = vunpack.c.l.b16 %v64
    %v104 = vunpack.c.l.b16 %v65
    %v105 = vunpack.c.l.b16 %v66
    %v106 = vunpack.c.l.b16 %v67
    %v107 = vunpack.c.l.b16 %v68
    %v108 = vunpack.c.l.b16 %v69
    %v109 = vunpack.c.l.b16 %v70
    %v110 = vunpack.c.l.b16 %v71
    %v111 = vunpack.c.l.b16 %v72
    %v112 = vunpack.c.l.b16 %v73
    %v113 = vunpack.c.l.b16 %v74
    %v114 = vunpack.c.l.b16 %v75
    %v115 = vunpack.c.l.b16 %v76
    %v116 = vunpack.c.l.b16 %v77
    %v117 = vpack.c.b16 %v102, %v101
    %v118 = vpack.c.b16 %v104, %v103
    %v119 = vpack.c.b16 %v106, %v105
    %v120 = vpack.c.b16 %v108, %v107
    %v121 = vpack.c.b16 %v110, %v109
    %v122 = vpack.c.b16 %v112, %v111
    %v123 = vpack.c.b16 %v114, %v113
    %v124 = vpack.c.b16 %v116, %v115
    %133 = vmatprep.subr.bf16.mxu0 0
    %134 = vmatpush1.bf16.msra.mxu0 %v117
    %135 = vmatprep.subr.bf16.mxu0 0
    %136 = vmatpush1.bf16.msra.mxu0 %v118
    %137 = vmatprep.subr.bf16.mxu0 0
    %138 = vmatpush1.bf16.msra.mxu0 %v119
    %139 = vmatprep.subr.bf16.mxu0 0
    %140 = vmatpush1.bf16.msra.mxu0 %v120
    %141 = vmatprep.subr.bf16.mxu0 0
    %142 = vmatpush1.bf16.msra.mxu0 %v121
    %143 = vmatprep.subr.bf16.mxu0 0
    %144 = vmatpush1.bf16.msra.mxu0 %v122
    %145 = vmatprep.subr.bf16.mxu0 0
    %146 = vmatpush1.bf16.msra.mxu0 %v123
    %147 = vmatprep.subr.bf16.mxu0 0
    %148 = vmatpush1.bf16.msra.mxu0 %v124
    %149 = vmatprep.subr.bf16.mxu0 0
    %150 = vmatpush1.bf16.msra.mxu0 0
    %151 = vmatprep.subr.bf16.mxu0 0
    %152 = vmatpush1.bf16.msra.mxu0 0
    %153 = vmatprep.subr.bf16.mxu0 0
    %154 = vmatpush1.bf16.msra.mxu0 0
    %155 = vmatprep.subr.bf16.mxu0 0
    %156 = vmatpush1.bf16.msra.mxu0 0
    %157 = vmatprep.subr.bf16.mxu0 0
    %158 = vmatpush1.bf16.msra.mxu0 0
    %159 = vmatprep.subr.bf16.mxu0 0
    %160 = vmatpush1.bf16.msra.mxu0 0
    %161 = vmatprep.subr.bf16.mxu0 0
    %162 = vmatpush1.bf16.msra.mxu0 0
    %163 = vmatprep.subr.bf16.mxu0 0
    %164 = vmatpush1.bf16.msra.mxu0 0
    %165 = vmatprep.mubr.bf16.mxu0 0
    %166 = vmatmul.mubr.bf16.gmra.mrb[0].mxu0 %v61
    %v167 = vpop.f32.mrb[0].mxu0
    %v168 = vadd.f32 %v83, %v167
    %v169 = vpop.f32.mrb[0].mxu0
    %v170 = vpop.f32.mrb[0].mxu0
    %v171 = vpop.f32.mrb[0].mxu0
    %172 = vdwg.mxu0
    %vm173 = vcmp.gt.f32.partialorder %v168, 0.0
    %v174 = vmin.f32 %v168, 0.0
    %v175 = vmul.f32 %v174, 1.442695
    %v176 = vpow.pop %v175
    %v177 = vsub.f32 %v176, 1.0
    %v178 = vsel %vm173, %v168, %v177
    %v179 = vpack.c.bf16 %v178, %v178
    %v180 = vld [vmem:[#allocation2] sm:$0xf]
    %v181 = vld [vmem:[#allocation2 + $0x4] sm:$0xf]
    %v182 = vld [vmem:[#allocation2 + $0x8] sm:$0xf]
    %v183 = vld [vmem:[#allocation2 + $0xc] sm:$0xf]
    %v184 = vld [vmem:[#allocation2 + $0x10] sm:$0xf]
    %v185 = vld [vmem:[#allocation2 + $0x14] sm:$0xf]
    %v186 = vld [vmem:[#allocation2 + $0x18] sm:$0xf]
    %v187 = vld [vmem:[#allocation2 + $0x1c] sm:$0xf]
    %v188 = vld [vmem:[#allocation2 + $0x20] sm:$0xf]
    %v189 = vld [vmem:[#allocation2 + $0x24] sm:$0xf]
    %v190 = vld [vmem:[#allocation2 + $0x28] sm:$0xf]
    %v191 = vld [vmem:[#allocation2 + $0x2c] sm:$0xf]
    %v192 = vld [vmem:[#allocation2 + $0x30] sm:$0xf]
    %v193 = vld [vmem:[#allocation2 + $0x34] sm:$0xf]
    %v194 = vld [vmem:[#allocation2 + $0x38] sm:$0xf]
    %v195 = vld [vmem:[#allocation2 + $0x3c] sm:$0xf]
    %v196 = vld [vmem:[%s5] sm:$0x1]
    %v198 = vlaneseq
    %v199 = vshrl.u32 %v198, 7
    %v200 = vsub.s32 0, %v199
    %v201 = vrot.slane %v196, %v200
    %v219 = vunpack.c.l.b16 %v180
    %v220 = vunpack.c.l.b16 %v181
    %v221 = vunpack.c.l.b16 %v182
    %v222 = vunpack.c.l.b16 %v183
    %v223 = vunpack.c.l.b16 %v184
    %v224 = vunpack.c.l.b16 %v185
    %v225 = vunpack.c.l.b16 %v186
    %v226 = vunpack.c.l.b16 %v187
    %v227 = vunpack.c.l.b16 %v188
    %v228 = vunpack.c.l.b16 %v189
    %v229 = vunpack.c.l.b16 %v190
    %v230 = vunpack.c.l.b16 %v191
    %v231 = vunpack.c.l.b16 %v192
    %v232 = vunpack.c.l.b16 %v193
    %v233 = vunpack.c.l.b16 %v194
    %v234 = vunpack.c.l.b16 %v195
    %v235 = vpack.c.b16 %v220, %v219
    %v236 = vpack.c.b16 %v222, %v221
    %v237 = vpack.c.b16 %v224, %v223
    %v238 = vpack.c.b16 %v226, %v225
    %v239 = vpack.c.b16 %v228, %v227
    %v240 = vpack.c.b16 %v230, %v229
    %v241 = vpack.c.b16 %v232, %v231
    %v242 = vpack.c.b16 %v234, %v233
    %251 = vmatprep.subr.bf16.mxu0 0
    %252 = vmatpush1.bf16.msra.mxu0 %v235
    %253 = vmatprep.subr.bf16.mxu0 0
    %254 = vmatpush1.bf16.msra.mxu0 %v236
    %255 = vmatprep.subr.bf16.mxu0 0
    %256 = vmatpush1.bf16.msra.mxu0 %v237
    %257 = vmatprep.subr.bf16.mxu0 0
    %258 = vmatpush1.bf16.msra.mxu0 %v238
    %259 = vmatprep.subr.bf16.mxu0 0
    %260 = vmatpush1.bf16.msra.mxu0 %v239
    %261 = vmatprep.subr.bf16.mxu0 0
    %262 = vmatpush1.bf16.msra.mxu0 %v240
    %263 = vmatprep.subr.bf16.mxu0 0
    %264 = vmatpush1.bf16.msra.mxu0 %v241
    %265 = vmatprep.subr.bf16.mxu0 0
    %266 = vmatpush1.bf16.msra.mxu0 %v242
    %267 = vmatprep.subr.bf16.mxu0 0
    %268 = vmatpush1.bf16.msra.mxu0 0
    %269 = vmatprep.subr.bf16.mxu0 0
    %270 = vmatpush1.bf16.msra.mxu0 0
    %271 = vmatprep.subr.bf16.mxu0 0
    %272 = vmatpush1.bf16.msra.mxu0 0
    %273 = vmatprep.subr.bf16.mxu0 0
    %274 = vmatpush1.bf16.msra.mxu0 0
    %275 = vmatprep.subr.bf16.mxu0 0
    %276 = vmatpush1.bf16.msra.mxu0 0
    %277 = vmatprep.subr.bf16.mxu0 0
    %278 = vmatpush1.bf16.msra.mxu0 0
    %279 = vmatprep.subr.bf16.mxu0 0
    %280 = vmatpush1.bf16.msra.mxu0 0
    %281 = vmatprep.subr.bf16.mxu0 0
    %282 = vmatpush1.bf16.msra.mxu0 0
    %283 = vmatprep.mubr.bf16.mxu0 0
    %284 = vmatmul.mubr.bf16.gmra.mrb[0].mxu0 %v179
    %v285 = vpop.f32.mrb[0].mxu0
    %v286 = vadd.f32 %v201, %v285
    %v287 = vpop.f32.mrb[0].mxu0
    %v288 = vpop.f32.mrb[0].mxu0
    %v289 = vpop.f32.mrb[0].mxu0
    %290 = vdwg.mxu0
    %vm291 = vcmp.gt.f32.partialorder %v286, 0.0
    %v292 = vmin.f32 %v286, 0.0
    %v293 = vmul.f32 %v292, 1.442695
    %v294 = vpow.pop %v293
    %v295 = vsub.f32 %v294, 1.0
    %v296 = vsel %vm291, %v286, %v295
    %v297 = vpack.c.bf16 %v296, %v296
    %v298 = vld [vmem:[#allocation4] sm:$0xf]
    %v299 = vld [vmem:[#allocation4 + $0x4] sm:$0xf]
    %v300 = vld [vmem:[#allocation4 + $0x8] sm:$0xf]
    %v301 = vld [vmem:[#allocation4 + $0xc] sm:$0xf]
    %v302 = vld [vmem:[#allocation4 + $0x10] sm:$0xf]
    %v303 = vld [vmem:[#allocation4 + $0x14] sm:$0xf]
    %v304 = vld [vmem:[#allocation4 + $0x18] sm:$0xf]
    %v305 = vld [vmem:[#allocation4 + $0x1c] sm:$0xf]
    %v306 = vld [vmem:[#allocation4 + $0x20] sm:$0xf]
    %v307 = vld [vmem:[#allocation4 + $0x24] sm:$0xf]
    %v308 = vld [vmem:[#allocation4 + $0x28] sm:$0xf]
    %v309 = vld [vmem:[#allocation4 + $0x2c] sm:$0xf]
    %v310 = vld [vmem:[#allocation4 + $0x30] sm:$0xf]
    %v311 = vld [vmem:[#allocation4 + $0x34] sm:$0xf]
    %v312 = vld [vmem:[#allocation4 + $0x38] sm:$0xf]
    %v313 = vld [vmem:[#allocation4 + $0x3c] sm:$0xf]
    %v314 = vld [vmem:[%s7] sm:$0x1]
    %v316 = vlaneseq
    %v317 = vshrl.u32 %v316, 7
    %v318 = vsub.s32 0, %v317
    %v319 = vrot.slane %v314, %v318
    %v337 = vunpack.c.l.b16 %v298
    %v338 = vunpack.c.l.b16 %v299
    %v339 = vunpack.c.l.b16 %v300
    %v340 = vunpack.c.l.b16 %v301
    %v341 = vunpack.c.l.b16 %v302
    %v342 = vunpack.c.l.b16 %v303
    %v343 = vunpack.c.l.b16 %v304
    %v344 = vunpack.c.l.b16 %v305
    %v345 = vunpack.c.l.b16 %v306
    %v346 = vunpack.c.l.b16 %v307
    %v347 = vunpack.c.l.b16 %v308
    %v348 = vunpack.c.l.b16 %v309
    %v349 = vunpack.c.l.b16 %v310
    %v350 = vunpack.c.l.b16 %v311
    %v351 = vunpack.c.l.b16 %v312
    %v352 = vunpack.c.l.b16 %v313
    %v353 = vpack.c.b16 %v338, %v337
    %v354 = vpack.c.b16 %v340, %v339
    %v355 = vpack.c.b16 %v342, %v341
    %v356 = vpack.c.b16 %v344, %v343
    %v357 = vpack.c.b16 %v346, %v345
    %v358 = vpack.c.b16 %v348, %v347
    %v359 = vpack.c.b16 %v350, %v349
    %v360 = vpack.c.b16 %v352, %v351
    %369 = vmatprep.subr.bf16.mxu0 0
    %370 = vmatpush1.bf16.msra.mxu0 %v353
    %371 = vmatprep.subr.bf16.mxu0 0
    %372 = vmatpush1.bf16.msra.mxu0 %v354
    %373 = vmatprep.subr.bf16.mxu0 0
    %374 = vmatpush1.bf16.msra.mxu0 %v355
    %375 = vmatprep.subr.bf16.mxu0 0
    %376 = vmatpush1.bf16.msra.mxu0 %v356
    %377 = vmatprep.subr.bf16.mxu0 0
    %378 = vmatpush1.bf16.msra.mxu0 %v357
    %379 = vmatprep.subr.bf16.mxu0 0
    %380 = vmatpush1.bf16.msra.mxu0 %v358
    %381 = vmatprep.subr.bf16.mxu0 0
    %382 = vmatpush1.bf16.msra.mxu0 %v359
    %383 = vmatprep.subr.bf16.mxu0 0
    %384 = vmatpush1.bf16.msra.mxu0 %v360
    %385 = vmatprep.subr.bf16.mxu0 0
    %386 = vmatpush1.bf16.msra.mxu0 0
    %387 = vmatprep.subr.bf16.mxu0 0
    %388 = vmatpush1.bf16.msra.mxu0 0
    %389 = vmatprep.subr.bf16.mxu0 0
    %390 = vmatpush1.bf16.msra.mxu0 0
    %391 = vmatprep.subr.bf16.mxu0 0
    %392 = vmatpush1.bf16.msra.mxu0 0
    %393 = vmatprep.subr.bf16.mxu0 0
    %394 = vmatpush1.bf16.msra.mxu0 0
    %395 = vmatprep.subr.bf16.mxu0 0
    %396 = vmatpush1.bf16.msra.mxu0 0
    %397 = vmatprep.subr.bf16.mxu0 0
    %398 = vmatpush1.bf16.msra.mxu0 0
    %399 = vmatprep.subr.bf16.mxu0 0
    %400 = vmatpush1.bf16.msra.mxu0 0
    %401 = vmatprep.mubr.bf16.mxu0 0
    %402 = vmatmul.mubr.bf16.gmra.mrb[0].mxu0 %v297
    %v403 = vpop.f32.mrb[0].mxu0
    %v404 = vadd.f32 %v319, %v403
    %v405 = vpop.f32.mrb[0].mxu0
    %v406 = vpop.f32.mrb[0].mxu0
    %v407 = vpop.f32.mrb[0].mxu0
    %408 = vdwg.mxu0
    %409 = vst [vmem:[%s8] sm:$0xff] %v404
    %v410 = vlaneseq
    %v411 = vand.u32 %v410, 127
    %vm412 = vcmp.lt.s32.totalorder %v411, 2
    %v413 = vsel %vm412, %v404, -1e+30
    %414 = vmax.xlane.f32.xlu0 %v413
    %v415 = vpop.xlane.xlu0 %414
    %v416 = vsub.f32 %v413, %v415
    %v417 = vmul.f32 %v416, 1.442695
    %v418 = vpow.pop %v417
    %419 = vadd.xlane.f32.xlu0 %v418
    %v420 = vpop.xlane.xlu0 %419
    %v421 = vrcp.pop %v420
    %v422 = vmul.f32 %v418, %v421
    %423 = vst [vmem:[%s9] sm:$0xff] %v422
    %v424 = vld [vmem:[%s1] sm:$0xff]
    %v425 = vrcp.pop %v424
    %v426 = vmul.f32 %v418, %v425
    %427 = vmax.xlane.f32.xlu0 %v426
    %v428 = vpop.xlane.xlu0 %427
    %vm429 = vcmp.ge.f32.partialorder %v426, %v428
    %v430 = vsel %vm429, %v411, 128
    %v431 = vand.u32 %v430, 65535
    %v432 = vshra.s32 %v430, 16
    %v433 = vcvt.s32.f32 %v431
    %v434 = vcvt.s32.f32 %v432
    %435 = vmin.xlane.f32.xlu0 %v434
    %v436 = vpop.xlane.xlu0 %435
    %vm437 = vcmp.eq.f32.partialorder %v434, %v436
    %v438 = vsel %vm437, %v433, inf
    %439 = vmin.xlane.f32.xlu0 %v438
    %v440 = vpop.xlane.xlu0 %439
    %v441 = vcvt.f32.s32 %v440
    %v442 = vcvt.f32.s32 %v436
    %v443 = vshll.u32 %v442, 16
    %v444 = vadd.s32 %v443, %v441
    %vm445 = vcmp.eq.s32.totalorder %v411, %v444
    %v446 = vsel %vm445, 1, 0
    %v447 = vcvt.s32.f32 %v446
    %v448 = vpack.c.bf16 %v447, %v447
    %449 = vst [vmem:[%s10] sm:$0xf] %v448
    // Predicated region
    $region42: #{actor_forward.1} parent=1 // pred_check
      _
    $region43: #{actor_forward.1} parent=1 // pred_check_branch
      %451 = sbr.rel (0) target = $region45
    $region44: #{actor_forward.1} parent=1 // pred_region
      _
    $region45: #{actor_forward.1} parent=1 // pred_fallthru
      _
    // Predicated region
    $region46: #{actor_forward.1} parent=1 // pred_check
      _
    $region47: #{actor_forward.1} parent=1 // pred_check_branch
      %453 = sbr.rel (0) target = $region49
    $region48: #{actor_forward.1} parent=1 // pred_region
      _
    $region49: #{actor_forward.1} parent=1 // pred_fallthru
      _
    // Predicated region
    $region50: #{actor_forward.1} parent=1 // pred_check
      _
    $region51: #{actor_forward.1} parent=1 // pred_check_branch
      %455 = sbr.rel (0) target = $region53
    $region52: #{actor_forward.1} parent=1 // pred_region
      _
    $region53: #{actor_forward.1} parent=1 // pred_fallthru
      _
    // Predicated region
    $region54: #{actor_forward.1} parent=1 // pred_check
      _
    $region55: #{actor_forward.1} parent=1 // pred_check_branch
      %457 = sbr.rel (0) target = $region57
    $region56: #{actor_forward.1} parent=1 // pred_region
      _
    $region57: #{actor_forward.1} parent=1 // pred_fallthru
      _
    // Predicated region
    $region58: #{actor_forward.1} parent=1 // pred_check
      _
    $region59: #{actor_forward.1} parent=1 // pred_check_branch
      %459 = sbr.rel (0) target = $region61
    $region60: #{actor_forward.1} parent=1 // pred_region
      _
    $region61: #{actor_forward.1} parent=1 // pred_fallthru
      _
    // Predicated region
    $region62: #{actor_forward.1} parent=1 // pred_check
      _
    $region63: #{actor_forward.1} parent=1 // pred_check_branch
      %461 = sbr.rel (0) target = $region65
    $region64: #{actor_forward.1} parent=1 // pred_region
      _
    $region65: #{actor_forward.1} parent=1 // pred_fallthru
      _
    %462 = vsyncpa [#allocation3], 1
    %463 = vsyncpa [#allocation5], 1

</llo_original>
